<compile_context>
chip_gen: v7x
topology: tpu7x:2x2x1
jax: 0.10.0
libtpu: 0.0.40
codegen_flags: <defaults>
</compile_context>

<pallas_src>
import functools

import jax
import jax.numpy as jnp
from jax.experimental import pallas as pl
from jax.experimental.pallas import tpu as pltpu
import numpy as np


def _wscale_kernel(x_ref, b_ref, o_ref, *, scale):
    # Works for both layouts:
    #   3D: x_ref (1, C, T_HW), b_ref (1, C, 1)
    #   2D: x_ref (1, L),       b_ref (1, L)
    o_ref[...] = x_ref[...] * scale + b_ref[...]


def _vmem_ceiling_bytes(frac=0.70, fallback=64 << 20):
    """Generation-aware VMEM ceiling (v5e/v6e: 128 MiB, v7x: 64 MiB)."""
    try:
        cap = pltpu.get_tpu_info().vmem_capacity_bytes
    except Exception:  # pragma: no cover - conservative fallback
        cap = fallback
    return int(frac * cap)


def _pick_hw_tile(hw, c, itemsize, n, target_block_bytes=8 * 1024 * 1024):
    """Pick T_HW for a (1, C, T_HW) block.

    - Prefer T_HW == HW (single fully contiguous DMA) when it fits the budget.
    - Otherwise the largest multiple of 128 under the budget, with a floor
      keeping each contiguous row >= ~1 KiB for DMA efficiency.
    - If the whole grid would be a single step, split HW so v7x's two
      TensorCores both get work.
    """
    max_t = target_block_bytes // max(c * itemsize, 1)

    if hw <= max_t:
        t = hw                                # full extent: one contiguous copy
    else:
        t = (max_t // 128) * 128
        # keep per-row contiguous chunk >= ~1 KiB (256 lanes f32, 512 lanes bf16)
        min_row = ((max(128, 1024 // max(itemsize, 1)) + 127) // 128) * 128
        t = max(t, min(min_row, hw))
        if t <= 0:
            t = min(128, hw)

    # Guarantee >= 2 grid steps for v7x dual-TC sharding when splittable.
    if n * pl.cdiv(hw, t) < 2 and hw > 128:
        half = ((hw // 2 + 127) // 128) * 128
        t = max(128, min(t, half))

    return t


def wscale_forward(x_nchw, b, *, fan_in, gain=float(np.sqrt(2.0)), donate_x=False):
    """y = x * (gain / sqrt(fan_in)) + b[None, :, None, None].

    x_nchw: (N, C, H, W)  float32 or bfloat16 (bf16 halves HBM traffic)
    b:      (C,)          per-channel bias
    fan_in: fan-in of the preceding layer (in_ch * kh * kw in GAN usage).
    donate_x: alias x's buffer for the output (only if x is dead afterwards).
    """
    N, C, H, W = x_nchw.shape
    HW = H * W
    scale = float(gain) / float(np.sqrt(fan_in))
    dtype = x_nchw.dtype
    itemsize = jnp.dtype(dtype).itemsize
    kernel = functools.partial(_wscale_kernel, scale=scale)
    vmem_ceiling = _vmem_ceiling_bytes()
    io_alias = {0: 0} if donate_x else {}

    if HW < 128:
        # Early-stage fallback: lane-dense (N, C*HW) layout with a
        # pre-expanded bias plane (constant block index -> fetched once).
        L = C * HW
        x_flat = x_nchw.reshape(N, L)
        b_plane = jnp.repeat(b.astype(dtype), HW).reshape(1, L)

        block_bytes = L * itemsize
        vmem_limit = int(min(max(4 * block_bytes + (4 << 20), 16 << 20),
                             vmem_ceiling))

        out_flat = pl.pallas_call(
            kernel,
            out_shape=jax.ShapeDtypeStruct((N, L), dtype),
            grid_spec=pltpu.PrefetchScalarGridSpec(
                num_scalar_prefetch=0,
                grid=(N,),
                in_specs=[
                    pl.BlockSpec((1, L), lambda n: (n, 0)),
                    pl.BlockSpec((1, L), lambda n: (0, 0)),
                ],
                out_specs=pl.BlockSpec((1, L), lambda n: (n, 0)),
            ),
            compiler_params=pltpu.CompilerParams(
                dimension_semantics=("parallel",),
                vmem_limit_bytes=vmem_limit,
            ),
            input_output_aliases=io_alias,
        )(x_flat, b_plane)
        return out_flat.reshape(N, C, H, W)

    # Main path: (N, C, HW), spatial axis lane-dense.
    x_flat = x_nchw.reshape(N, C, HW)
    b_blk = b.reshape(1, C, 1).astype(dtype)   # broadcasts in-kernel

    t_hw = _pick_hw_tile(HW, C, itemsize, N)
    n_hw_tiles = pl.cdiv(HW, t_hw)

    # 2x double-buffered input + 2x output blocks + bias tile + headroom,
    # capped below the generation's physical VMEM.
    block_bytes = C * t_hw * itemsize
    vmem_limit = int(min(max(4 * block_bytes + (4 << 20), 16 << 20), vmem_ceiling))

    out_flat = pl.pallas_call(
        kernel,
        out_shape=jax.ShapeDtypeStruct((N, C, HW), dtype),
        grid_spec=pltpu.PrefetchScalarGridSpec(
            num_scalar_prefetch=0,
            grid=(N, n_hw_tiles),
            in_specs=[
                pl.BlockSpec((1, C, t_hw), lambda n, j: (n, 0, j)),
                pl.BlockSpec((1, C, 1), lambda n, j: (0, 0, 0)),
            ],
            out_specs=pl.BlockSpec((1, C, t_hw), lambda n, j: (n, 0, j)),
        ),
        compiler_params=pltpu.CompilerParams(
            dimension_semantics=("parallel", "parallel"),
            vmem_limit_bytes=vmem_limit,
        ),
        input_output_aliases=io_alias,
    )(x_flat, b_blk)

    return out_flat.reshape(N, C, H, W)


if __name__ == "__main__":
    key = jax.random.PRNGKey(0)
    kx, kb, kx2, kb2 = jax.random.split(key, 4)

    gain = float(np.sqrt(2.0))

    # Main path: small NCHW shape consistent with the module's forward.
    N, C, H, W = 2, 4, 16, 16
    fan_in = C * 3 * 3  # stand-in for the preceding conv's fan-in (in_ch*kh*kw)
    x = jax.random.normal(kx, (N, C, H, W), dtype=jnp.float32)
    b = jax.random.normal(kb, (C,), dtype=jnp.float32)  # stands in for torch.randn(size)

    y = wscale_forward(x, b, fan_in=fan_in, gain=gain)
    y = jax.block_until_ready(y)

    scale = gain / float(np.sqrt(fan_in))
    y_ref = x * scale + b[None, :, None, None]
    np.testing.assert_allclose(np.asarray(y), np.asarray(y_ref), rtol=1e-6, atol=1e-6)

    # Fallback path: HW < 128 (early ProgressiveGAN stage layout).
    N2, C2, H2, W2 = 2, 8, 4, 4
    fan_in2 = C2 * 3 * 3
    x2 = jax.random.normal(kx2, (N2, C2, H2, W2), dtype=jnp.float32)
    b2 = jax.random.normal(kb2, (C2,), dtype=jnp.float32)

    y2 = wscale_forward(x2, b2, fan_in=fan_in2, gain=gain)
    y2 = jax.block_until_ready(y2)

    scale2 = gain / float(np.sqrt(fan_in2))
    y2_ref = x2 * scale2 + b2[None, :, None, None]
    np.testing.assert_allclose(np.asarray(y2), np.asarray(y2_ref), rtol=1e-6, atol=1e-6)

    print("KERNEL_OK")
</pallas_src>

<mosaic_0001>
module attributes {stable_mosaic.version = 11 : i64} {
  func.func @_wscale_kernel(%arg0: i32, %arg1: i32, %arg2: memref<1x4x256xf32, #tpu.memory_space<vmem>>, %arg3: memref<1x4x1xf32, #tpu.memory_space<vmem>>, %arg4: memref<1x4x256xf32, #tpu.memory_space<vmem>>) attributes {dimension_semantics = [#tpu.dimension_semantics<parallel>, #tpu.dimension_semantics<parallel>], iteration_bounds = array<i64: 2, 1>, scalar_prefetch = 0 : i64, scratch_operands = 0 : i64, tpu.core_type = #tpu.core_type<tc>, window_params = [{transform_indices = @transform_0, window_bounds = array<i64: 1, 4, 256>}, {pipeline_mode = #tpu.pipeline_mode<synchronous>, transform_indices = @transform_1, window_bounds = array<i64: 1, 4, 1>}, {transform_indices = @transform_2, window_bounds = array<i64: 1, 4, 256>}]} {
    %c0 = arith.constant 0 : index
    %c0_0 = arith.constant 0 : index
    %c0_1 = arith.constant 0 : index
    %0 = vector.load %arg2[%c0, %c0_0, %c0_1] : memref<1x4x256xf32, #tpu.memory_space<vmem>>, vector<1x4x256xf32>
    %cst = arith.constant 0.235702261 : f32
    %1 = vector.broadcast %cst : f32 to vector<1x4x256xf32>
    %2 = arith.mulf %0, %1 : vector<1x4x256xf32>
    %c0_2 = arith.constant 0 : index
    %c0_3 = arith.constant 0 : index
    %c0_4 = arith.constant 0 : index
    %3 = vector.load %arg3[%c0_2, %c0_3, %c0_4] : memref<1x4x1xf32, #tpu.memory_space<vmem>>, vector<1x4x1xf32>
    %4 = vector.broadcast %3 : vector<1x4x1xf32> to vector<1x4x256xf32>
    %5 = arith.addf %2, %4 : vector<1x4x256xf32>
    %c0_5 = arith.constant 0 : index
    %c0_6 = arith.constant 0 : index
    %c0_7 = arith.constant 0 : index
    %6 = vector.load %arg4[%c0_5, %c0_6, %c0_7] : memref<1x4x256xf32, #tpu.memory_space<vmem>>, vector<1x4x256xf32>
    tpu.vector_store %arg4[%c0_5, %c0_6, %c0_7], %5 {strides = array<i32>} : memref<1x4x256xf32, #tpu.memory_space<vmem>>, vector<1x4x256xf32>,
    return
  }
  func.func @transform_0(%arg0: i32, %arg1: i32) -> (i32, i32, i32) {
    %c0_i32 = arith.constant 0 : i32
    %c0_i32_0 = arith.constant 0 : i32
    return %arg0, %c0_i32, %arg1 : i32, i32, i32
  }
  func.func @transform_1(%arg0: i32, %arg1: i32) -> (i32, i32, i32) {
    %c0_i32 = arith.constant 0 : i32
    %c0_i32_0 = arith.constant 0 : i32
    %c0_i32_1 = arith.constant 0 : i32
    %c0_i32_2 = arith.constant 0 : i32
    return %c0_i32, %c0_i32_0, %c0_i32_1 : i32, i32, i32
  }
  func.func @transform_2(%arg0: i32, %arg1: i32) -> (i32, i32, i32) {
    %c0_i32 = arith.constant 0 : i32
    %c0_i32_0 = arith.constant 0 : i32
    return %arg0, %c0_i32, %arg1 : i32, i32, i32
  }
}

</mosaic_0001>

<llo_original>
// kernel: tpu_custom_call.1
$region0: #{tpu_custom_call.1}
  #allocation0 [shape = 'u32[]', space=smem, size = 0x4, offset = 0x4, fixed_abs, tag = 'smem constant byte address 0x4 - core index']
  #allocation1 [shape = 'u32[144,128]{1,0:T(1,128)}', space=vmem, size = 0x12000, scoped, tag = 'internal scratch']
  %s0 = inlined_call_operand.hbm [shape: f32[2,4,256], index: 0, kind: input, shape index: {}]
  %s1 = inlined_call_operand.vmem [shape: f32[1,4,1], index: 1, kind: input, shape index: {}]
  %s2 = inlined_call_operand.hbm [shape: f32[2,4,256], index: 2, kind: output, shape index: {}]
  %s3 = sld [smem:[#allocation0]]
  $region45: #{tpu_custom_call.1} parent=0
    _
  %s5 = ssub.s32 1, %s3
  %s6 = scalar_select 0, %s5, %s3
  $region1: #{tpu_custom_call.1} parent=0
    #allocation2 [shape = 'u8[8192]{0}', space=vmem, size = 0x2000, scoped, tag = 'input window, operand 0']
    #allocation3 [shape = 's32[2]{0}', space=sflag, size = 0x8, scoped, tag = 'scoped memory for tpu_custom_call.1']
    #allocation4 [shape = 's32[2]{0}', space=sflag, size = 0x8, scoped, tag = 'scoped memory for tpu_custom_call.1']
    #allocation5 [shape = 'u8[8192]{0}', space=vmem, size = 0x2000, scoped, tag = 'output window, operand 0']
    %7 = vsyncpa [#allocation3], 0
    %s8 = scalar_lea.sflag [#allocation3], 1
    %9 = vsyncpa %s8, 0
    %10 = vsyncpa [#allocation4], 0
    %s11 = scalar_lea.sflag [#allocation4], 1
    %12 = vsyncpa %s11, 0
    loop: start=0, step=1, limit=4
    $region2: #{tpu_custom_call.1} parent=1 // loop_pre_header
      _
    $region3: #{tpu_custom_call.1} parent=1 // loop_header
      %s14 = sphi 0, %s18
      %p15 = scmp.ge.s32.totalorder %s14, 4
      %s21 = sphi 0, %s33
      %s22 = sphi 0, %s29
      %s23 = sphi 0, %s21
      %s24 = sphi 0, %s22
      %s25 = sphi 0, %s23
      %s26 = sphi 0, %s24
      %s38 = sphi 0, %s40
      %s41 = sphi 0, %s38
      %s42 = sphi 0, %s41
      %s58 = sphi 0, %s42
      %s62 = sphi 0, %s62
      %s64 = sphi 0, %s62
      %s65 = sphi 0, %s64
      %s79 = sphi 0, %s65
      %s87 = sphi 0, %s89
      %s90 = sphi 0, %s87
      %s91 = sphi 0, %s90
      %s107 = sphi 0, %s91
    $region4: #{tpu_custom_call.1} parent=1 // loop_header_branch
      %17 = sbr.rel (%p15) target = $region8
    $region5: #{tpu_custom_call.1} parent=1 // loop_body
      %s19 = ssub.s32 %s14, 1
      %s20 = ssub.s32 %s14, 2
      %s27 = sadd.s32 1, %s22
      %p28 = scmp.ge.s32.totalorder %s27, 1
      %s29 = scalar_select %p28, 0, %s27
      %s30 = sadd.s32 1, %s21
      %s31 = scalar_select %p28, %s30, %s21
      %p32 = scmp.ge.s32.totalorder %s31, 2
      %s33 = scalar_select %p32, 0, %s31
      %s34 = ssub.s32 %s21, %s33
      %s35 = ssub.s32 %s22, %s29
      %s36 = sor.u32 %s34, %s35
      %p37 = scmp.eq.s32.totalorder %s36, 0
      %s39 = sadd.s32 %s38, 1
      %s40 = scalar_select %p37, %s38, %s39
      %p43 = pneg %p37
      %p44 = scmp.eq.s32.totalorder %s14, 1
      %p45 = por %p43, %p44
      %p46 = scmp.ne.s32.totalorder %s38, %s41
      %p47 = scmp.eq.s32.totalorder %s14, 0
      %p48 = por %p46, %p47
      %p49 = scmp.ne.s32.totalorder %s38, %s41
      %p50 = scmp.eq.s32.totalorder %s19, 1
      %p51 = por %p49, %p50
      %p52 = scmp.ne.s32.totalorder %s41, %s42
      %p53 = scmp.eq.s32.totalorder %s19, 0
      %p54 = por %p52, %p53
      %p55 = scmp.ne.s32.totalorder %s41, %s42
      %p56 = scmp.eq.s32.totalorder %s20, 1
      %p57 = por %p55, %p56
      %p59 = scmp.ne.s32.totalorder %s42, %s58
      %p60 = scmp.eq.s32.totalorder %s20, 0
      %p61 = por %p59, %p60
      %s63 = sadd.s32 %s62, 1
      %p66 = scmp.eq.s32.totalorder %s14, 1
      %p67 = scmp.ne.s32.totalorder %s62, %s64
      %p68 = scmp.eq.s32.totalorder %s14, 0
      %p69 = por %p67, %p68
      %p70 = scmp.ne.s32.totalorder %s62, %s64
      %p71 = scmp.eq.s32.totalorder %s19, 1
      %p72 = por %p70, %p71
      %p73 = scmp.ne.s32.totalorder %s64, %s65
      %p74 = scmp.eq.s32.totalorder %s19, 0
      %p75 = por %p73, %p74
      %p76 = scmp.ne.s32.totalorder %s64, %s65
      %p77 = scmp.eq.s32.totalorder %s20, 1
      %p78 = por %p76, %p77
      %p80 = scmp.ne.s32.totalorder %s65, %s79
      %p81 = scmp.eq.s32.totalorder %s20, 0
      %p82 = por %p80, %p81
      %s83 = ssub.s32 %s21, %s33
      %s84 = ssub.s32 %s22, %s29
      %s85 = sor.u32 %s83, %s84
      %p86 = scmp.eq.s32.totalorder %s85, 0
      %s88 = sadd.s32 %s87, 1
      %s89 = scalar_select %p86, %s87, %s88
      %p92 = pneg %p86
      %p93 = scmp.eq.s32.totalorder %s14, 1
      %p94 = por %p92, %p93
      %p95 = scmp.ne.s32.totalorder %s87, %s90
      %p96 = scmp.eq.s32.totalorder %s14, 0
      %p97 = por %p95, %p96
      %p98 = scmp.ne.s32.totalorder %s87, %s90
      %p99 = scmp.eq.s32.totalorder %s19, 1
      %p100 = por %p98, %p99
      %p101 = scmp.ne.s32.totalorder %s90, %s91
      %p102 = scmp.eq.s32.totalorder %s19, 0
      %p103 = por %p101, %p102
      %p104 = scmp.ne.s32.totalorder %s90, %s91
      %p105 = scmp.eq.s32.totalorder %s20, 1
      %p106 = por %p104, %p105
      %p108 = scmp.ne.s32.totalorder %s91, %s107
      %p109 = scmp.eq.s32.totalorder %s20, 0
      %p110 = por %p108, %p109
      %p111 = scmp.le.s32.totalorder 1, %s14
      %p112 = scmp.lt.s32.totalorder %s14, 3
      %p113 = pnand %p111, %p112
      %p114 = pneg %p113
      // Predicated region
      $region9: #{tpu_custom_call.1} parent=5 // pred_check
        _
      $region10: #{tpu_custom_call.1} parent=5 // pred_check_branch
        %116 = sbr.rel (%p113) target = $region12
      $region11: #{tpu_custom_call.1} parent=5 // pred_region
        %s117 = ssub.s32 %s14, 1
        // Predicated region
        $region13: #{tpu_custom_call.1} parent=11 // pred_check
          %p118 = pneg %p75
        $region14: #{tpu_custom_call.1} parent=11 // pred_check_branch
          %120 = sbr.rel (%p118) target = $region16
        $region15: #{tpu_custom_call.1} parent=11 // pred_region
          _
        $region16: #{tpu_custom_call.1} parent=11 // pred_fallthru
          _
      $region12: #{tpu_custom_call.1} parent=5 // pred_fallthru
        _
      %p121 = scmp.lt.s32.totalorder %s14, 2
      // Predicated region
      $region17: #{tpu_custom_call.1} parent=5 // pred_check
        %p122 = pneg %p121
      $region18: #{tpu_custom_call.1} parent=5 // pred_check_branch
        %124 = sbr.rel (%p122) target = $region20
      $region19: #{tpu_custom_call.1} parent=5 // pred_region
        // Predicated region
        $region21: #{tpu_custom_call.1} parent=19 // pred_check
          %p125 = pneg %p48
        $region22: #{tpu_custom_call.1} parent=19 // pred_check_branch
          %127 = sbr.rel (%p125) target = $region24
        $region23: #{tpu_custom_call.1} parent=19 // pred_region
          %s128 = sand.u32 %s38, 1
          %s129 = scalar_lea.sflag [#allocation3], %s128
          %s130 = sand.u32 %s38, 1
          %s131 = smul.addr %s130, 8
          %s132 = scalar_lea.vmem [#allocation2], %s131
          %s133 = smul.u32 2, %s22
          %s135 = ssub.s32 128, 128
          %136 = vsyncadd %s129, %s135
          %s137 = smul.addr %s21, 2
          %s138 = sadd.s32 %s133, %s137
          %s139 = smul.addr %s138, 64
          %s140 = scalar_lea.hbm %s0, %s139
          %s142 = sshll.u32 %s132, 4
          %s143 = int_to_ptr.vmem [resolvable:$true] %s142
          %145 = dma.hbm_to_vmem [thread:$0]  %s140, 128, %s143, %s129
        $region24: #{tpu_custom_call.1} parent=19 // pred_fallthru
          _
      $region20: #{tpu_custom_call.1} parent=5 // pred_fallthru
        _
      %p146 = scmp.le.s32.totalorder 1, %s14
      %p147 = scmp.lt.s32.totalorder %s14, 3
      %p148 = pnand %p146, %p147
      %p149 = pneg %p148
      // Predicated region
      $region25: #{tpu_custom_call.1} parent=5 // pred_check
        _
      $region26: #{tpu_custom_call.1} parent=5 // pred_check_branch
        %151 = sbr.rel (%p148) target = $region28
      $region27: #{tpu_custom_call.1} parent=5 // pred_region
        %s152 = ssub.s32 %s14, 1
        %s153 = sand.u32 %s41, 1
        %s154 = scalar_lea.sflag [#allocation3], %s153
        %s155 = sand.u32 %s41, 1
        %s156 = smul.addr %s155, 8
        %s157 = scalar_lea.vmem [#allocation2], %s156
        // Predicated region
        $region29: #{tpu_custom_call.1} parent=27 // pred_check
          %p158 = pneg %p54
        $region30: #{tpu_custom_call.1} parent=27 // pred_check_branch
          %160 = sbr.rel (%p158) target = $region32
        $region31: #{tpu_custom_call.1} parent=27 // pred_region
          %161 = dma.done %s154, 128
        $region32: #{tpu_custom_call.1} parent=27 // pred_fallthru
          _
        %s162 = sand.u32 %s41, 1
        %s163 = scalar_lea.sflag [#allocation3], %s162
        %s164 = sand.u32 %s41, 1
        %s165 = smul.addr %s164, 8
        %s166 = scalar_lea.vmem [#allocation2], %s165
        %p167 = pneg %p54
        %p168 = pneg %p51
        %p169 = pneg %p75
        %p170 = pneg %p72
        %p171 = pneg %p103
        %p172 = pneg %p100
        %s173 = sand.u32 %s90, 1
        %s174 = scalar_lea.sflag [#allocation4], %s173
        %s175 = sand.u32 %s90, 1
        %s176 = smul.addr %s175, 8
        %s177 = scalar_lea.vmem [#allocation5], %s176
        %s178 = smul.u32 2, %s24
        %s179 = smul.u32 2, %s24
        %v180 = vld [vmem:[%s157] sm:$0xff]
        %v181 = vmul.f32 %v180, 0.23570226
        %v182 = vld [vmem:[%s1] sm:$0xf]
        %184 = vset.pattern.permute.xlu0 0
        %185 = vperm.xlu0 %184, %v182
        %v186 = vpop.permute.xlu0 %185
        %v188 = vunpack.c.l.s4 839922192
        %v189 = vunpack.c.0.s8 %v188
        %v190 = vlaneseq
        %v191 = vshrl.u32 %v190, 7
        %v192 = vsub.s32 %v189, %v191
        %v193 = vrot.slane %v186, %v192
        %v195 = vadd.f32 %v181, %v193
        %196 = vst [vmem:[%s177] sm:$0xff] %v195
        %s197 = sand.u32 %s90, 1
        %s198 = scalar_lea.sflag [#allocation4], %s197
        %s199 = sand.u32 %s90, 1
        %s200 = smul.addr %s199, 8
        %s201 = scalar_lea.vmem [#allocation5], %s200
        // Predicated region
        $region33: #{tpu_custom_call.1} parent=27 // pred_check
          %p202 = pneg %p100
        $region34: #{tpu_custom_call.1} parent=27 // pred_check_branch
          %204 = sbr.rel (%p202) target = $region36
        $region35: #{tpu_custom_call.1} parent=27 // pred_region
          %s205 = smul.u32 2, %s24
          %s207 = ssub.s32 128, 128
          %208 = vsyncadd %s198, %s207
          %s209 = smul.addr %s23, 2
          %s210 = sadd.s32 %s205, %s209
          %s211 = smul.addr %s210, 64
          %s212 = scalar_lea.hbm %s2, %s211
          %s214 = sshll.u32 %s201, 4
          %s215 = int_to_ptr.vmem [resolvable:$true] %s214
          %217 = dma.vmem_to_hbm [thread:$0]  %s215, 128, %s212, %s198
        $region36: #{tpu_custom_call.1} parent=27 // pred_fallthru
          _
      $region28: #{tpu_custom_call.1} parent=5 // pred_fallthru
        _
      %p218 = scmp.le.s32.totalorder 2, %s14
      // Predicated region
      $region37: #{tpu_custom_call.1} parent=5 // pred_check
        %p219 = pneg %p218
      $region38: #{tpu_custom_call.1} parent=5 // pred_check_branch
        %221 = sbr.rel (%p219) target = $region40
      $region39: #{tpu_custom_call.1} parent=5 // pred_region
        %s222 = ssub.s32 %s14, 2
        // Predicated region
        $region41: #{tpu_custom_call.1} parent=39 // pred_check
          %p223 = pneg %p106
        $region42: #{tpu_custom_call.1} parent=39 // pred_check_branch
          %225 = sbr.rel (%p223) target = $region44
        $region43: #{tpu_custom_call.1} parent=39 // pred_region
          %s226 = sand.u32 %s91, 1
          %s227 = scalar_lea.sflag [#allocation4], %s226
          %s228 = sand.u32 %s91, 1
          %s229 = smul.addr %s228, 8
          %s230 = scalar_lea.vmem [#allocation5], %s229
          %231 = dma.done %s227, 128
        $region44: #{tpu_custom_call.1} parent=39 // pred_fallthru
          _
      $region40: #{tpu_custom_call.1} parent=5 // pred_fallthru
        _
    $region6: #{tpu_custom_call.1} parent=1 // loop_footer
      %s18 = sadd.s32 1, %s14
    $region7: #{tpu_custom_call.1} parent=1 // loop_footer_branch
      %13 = sbr.rel target = $region3
    $region8: #{tpu_custom_call.1} parent=1 // loop_exit
      _
    %232 = vsyncpa [#allocation3], 1
    %s233 = scalar_lea.sflag [#allocation3], 1
    %234 = vsyncpa %s233, 1
    %235 = vsyncpa [#allocation4], 1
    %s236 = scalar_lea.sflag [#allocation4], 1
    %237 = vsyncpa %s236, 1

</llo_original>
